<compile_context>
chip_gen: v7x
topology: tpu7x:2x2x1
jax: 0.10.0
libtpu: 0.0.40
codegen_flags: <defaults>
</compile_context>

<pallas_src>
import functools

import jax
import jax.numpy as jnp
from jax.experimental import pallas as pl
from jax.experimental.pallas import tpu as pltpu


# ----------------------------------------------------------------------------
# helpers
# ----------------------------------------------------------------------------

def _row_tile(n, pref=512):
    """Largest multiple of 8 that divides n and is <= pref (else n itself)."""
    if n <= pref:
        return n
    t = pref - (pref % 8)
    while t >= 8:
        if n % t == 0:
            return t
        t -= 8
    return n


_VMEM_LIMIT = 32 * 1024 * 1024  # safe on v5e / v6e / v7x


# ----------------------------------------------------------------------------
# Pallas kernels
# ----------------------------------------------------------------------------

def linear_kernel(x_ref, wT_ref, b_ref, o_ref, *, activation=None):
    """y = x @ W^T + b (row tile)."""
    y = jnp.dot(x_ref[...], wT_ref[...],
                preferred_element_type=jnp.float32) + b_ref[...]
    if activation == "relu":
        y = jnp.maximum(y, 0.0)
    o_ref[...] = y


def bilstm_highway_kernel(xp_ref, whhT_f_ref, whhT_b_ref, out_ref):
    """One bidirectional HighwayLSTM layer, whole sequence resident in VMEM.

    xp_ref : (T, B, 12H) precomputed x-projections (biases folded in), columns:
             [fwd gates 4H | bwd gates 4H | hwy-gate 2H | hwy-transform 2H].
    out    : (T, B, 2H) = [h_fwd | h_bwd] + sigmoid(gate(x)) * tanh(hwy(x)).
    Gate order matches torch.nn.LSTM: (i, f, g, o); h0 = c0 = 0
    (taggerlstm_h_init / _c_init are zero parameters).
    """
    T, B, _ = out_ref.shape
    H = whhT_f_ref.shape[0]

    whh_f = whhT_f_ref[...]
    whh_b = whhT_b_ref[...]

    zeros = jnp.zeros((B, H), jnp.float32)
    h_f = c_f = zeros
    h_b = c_b = zeros

    def cell(gates, c_prev):
        sg = jax.nn.sigmoid(gates)      # one full-width EUP push (i, f, o lanes)
        th = jnp.tanh(gates)            # one full-width EUP push (g lanes)
        c = sg[:, H:2 * H] * c_prev + sg[:, 0:H] * th[:, 2 * H:3 * H]
        h = sg[:, 3 * H:4 * H] * jnp.tanh(c)
        return h, c

    # TODO(synk): static unroll is fine for short sentences; long sequences
    # should switch to a time-chunked fori_loop pipeline (budget v7x 64 MiB VMEM).
    for s in range(T):
        tb = T - 1 - s
        # forward direction, time s
        h_f, c_f = cell(
            xp_ref[s, :, 0:4 * H]
            + jnp.dot(h_f, whh_f, preferred_element_type=jnp.float32), c_f)
        out_ref[s, :, 0:H] = h_f
        # backward direction, time T-1-s
        h_b, c_b = cell(
            xp_ref[tb, :, 4 * H:8 * H]
            + jnp.dot(h_b, whh_b, preferred_element_type=jnp.float32), c_b)
        out_ref[tb, :, H:2 * H] = h_b

    # highway combine: out += sigmoid(gate(x)) * tanh(highway(x))
    gh = xp_ref[:, :, 8 * H:12 * H]          # (T, B, 4H), lane-aligned slice
    sg = jax.nn.sigmoid(gh)
    th = jnp.tanh(gh)
    out_ref[...] = out_ref[...] + sg[:, :, 0:2 * H] * th[:, :, 2 * H:4 * H]


def heads_kernel(x_ref, whidT_ref, bhid_ref, wclfT_ref, bclf_ref, tgt_ref,
                 preds_ref, stats_ref, *, head_sizes):
    """pos_hid (Linear+ReLU) -> all classifier heads in one lane-dense matmul
    -> per-head CE (ignore_index=0) + argmax, all without leaving VMEM.

    stats block layout (per row tile): row 0 = per-head sum of CE over valid
    rows, row 1 = per-head valid-row count (remaining lanes zero).
    """
    hid = jnp.dot(x_ref[...], whidT_ref[...],
                  preferred_element_type=jnp.float32) + bhid_ref[...]
    hid = jnp.maximum(hid, 0.0)
    logits = jnp.dot(hid, wclfT_ref[...],
                     preferred_element_type=jnp.float32) + bclf_ref[...]
    tgt_all = tgt_ref[...]

    loss_cols, valid_cols, pred_cols = [], [], []
    off = 0
    for h, C in enumerate(head_sizes):
        lg = logits[:, off:off + C]
        tgt = tgt_all[:, h:h + 1]
        col = jax.lax.broadcasted_iota(jnp.int32, lg.shape, 1)
        m = jnp.max(lg, axis=-1, keepdims=True)
        lse = m + jnp.log(jnp.sum(jnp.exp(lg - m), axis=-1, keepdims=True))
        tgt_logit = jnp.sum(jnp.where(col == tgt, lg, 0.0), axis=-1, keepdims=True)
        valid = (tgt != 0).astype(jnp.float32)
        loss_cols.append((lse - tgt_logit) * valid)
        valid_cols.append(valid)
        # argmax = first index achieving the max (same tie behavior as jnp.argmax)
        pred_cols.append(jnp.min(jnp.where(lg == m, col, C), axis=-1, keepdims=True))
        off += C

    nh = len(head_sizes)
    preds_ref[...] = jnp.concatenate(pred_cols, axis=1).astype(jnp.int32)
    loss_row = jnp.sum(jnp.concatenate(loss_cols, axis=1), axis=0, keepdims=True)
    valid_row = jnp.sum(jnp.concatenate(valid_cols, axis=1), axis=0, keepdims=True)
    stats_ref[...] = jnp.zeros_like(stats_ref)
    stats_ref[0, 0:1, 0:nh] = loss_row
    stats_ref[0, 1:2, 0:nh] = valid_row


# ----------------------------------------------------------------------------
# pallas_call wrappers
# ----------------------------------------------------------------------------

def linear(x, wT, b, activation=None):
    N, D = x.shape
    O = wT.shape[1]
    tn = _row_tile(N)
    return pl.pallas_call(
        functools.partial(linear_kernel, activation=activation),
        out_shape=jax.ShapeDtypeStruct((N, O), jnp.float32),
        grid=(N // tn,),
        in_specs=[pl.BlockSpec((tn, D), lambda i: (i, 0)),
                  pl.BlockSpec((D, O), lambda i: (0, 0)),
                  pl.BlockSpec((1, O), lambda i: (0, 0))],
        out_specs=pl.BlockSpec((tn, O), lambda i: (i, 0)),
        compiler_params=pltpu.CompilerParams(
            dimension_semantics=("parallel",),
            vmem_limit_bytes=_VMEM_LIMIT),
    )(x, wT, b)


def bilstm_highway(xp_tm, whhT_f, whhT_b):
    """xp_tm: (T, B, 12H) time-major fused x-projections. Returns (T, B, 2H)."""
    T, B, K = xp_tm.shape
    H = whhT_f.shape[0]
    return pl.pallas_call(
        bilstm_highway_kernel,
        out_shape=jax.ShapeDtypeStruct((T, B, 2 * H), jnp.float32),
        grid=(1,),
        in_specs=[pl.BlockSpec((T, B, K), lambda i: (0, 0, 0)),
                  pl.BlockSpec((H, 4 * H), lambda i: (0, 0)),
                  pl.BlockSpec((H, 4 * H), lambda i: (0, 0))],
        out_specs=pl.BlockSpec((T, B, 2 * H), lambda i: (0, 0, 0)),
        compiler_params=pltpu.CompilerParams(
            dimension_semantics=("arbitrary",),
            vmem_limit_bytes=_VMEM_LIMIT),
    )(xp_tm, whhT_f, whhT_b)


def fused_heads(x, whidT, bhid, wclfT, bclf, targets, head_sizes):
    """Returns (preds (N, n_heads) int32, stats (G, 2, 128) f32 per-tile sums)."""
    N, Din = x.shape
    deep = whidT.shape[1]
    Cpad = wclfT.shape[1]
    NH = len(head_sizes)
    tn = _row_tile(N)
    G = N // tn
    return pl.pallas_call(
        functools.partial(heads_kernel, head_sizes=tuple(head_sizes)),
        out_shape=(jax.ShapeDtypeStruct((N, NH), jnp.int32),
                   jax.ShapeDtypeStruct((G, 2, 128), jnp.float32)),
        grid=(G,),
        in_specs=[pl.BlockSpec((tn, Din), lambda i: (i, 0)),
                  pl.BlockSpec((Din, deep), lambda i: (0, 0)),
                  pl.BlockSpec((1, deep), lambda i: (0, 0)),
                  pl.BlockSpec((deep, Cpad), lambda i: (0, 0)),
                  pl.BlockSpec((1, Cpad), lambda i: (0, 0)),
                  pl.BlockSpec((tn, NH), lambda i: (i, 0))],
        out_specs=(pl.BlockSpec((tn, NH), lambda i: (i, 0)),
                   pl.BlockSpec((1, 2, 128), lambda i: (i, 0, 0))),
        compiler_params=pltpu.CompilerParams(
            dimension_semantics=("parallel",),
            vmem_limit_bytes=_VMEM_LIMIT),
    )(x, whidT, bhid, wclfT, bclf, targets)


# ----------------------------------------------------------------------------
# Tagger forward (eval mode)
# ----------------------------------------------------------------------------

def tagger_forward(params, word, pos, feats):
    """word/pos: (B, T) int32, feats: (B, T, NF) int32. Returns (loss, preds)."""
    B, T = word.shape
    N = B * T
    H = params["hidden"]
    head_sizes = params["head_sizes"]
    NH = len(head_sizes)
    NF = feats.shape[2]

    # Word embedding (padding_idx=0 row is zero). Gather is glue; done in XLA.
    word_emb = jnp.take(params["word_emb"], word, axis=0)              # (B, T, E)

    # pack(): equal sentlens -> time-major packed ordering (N = T*B rows).
    x_flat = jnp.transpose(word_emb, (1, 0, 2)).reshape(N, -1)

    # HighwayLSTM: per layer, one fused x-projection matmul + one recurrent kernel.
    for lp in params["lstm_layers"]:
        xp = linear(x_flat, lp["w_xT"], lp["b_x"])                     # (N, 12H)
        out_tm = bilstm_highway(xp.reshape(T, B, 12 * H),
                                lp["w_hhT_f"], lp["w_hhT_b"])          # (T, B, 2H)
        x_flat = out_tm.reshape(N, 2 * H)

    # packed targets: col 0 = pos, cols 1.. = feats (ignore_index = 0 everywhere).
    tgt = jnp.concatenate(
        [jnp.transpose(pos, (1, 0)).reshape(N, 1),
         jnp.transpose(feats, (1, 0, 2)).reshape(N, NF)],
        axis=1).astype(jnp.int32)

    preds_flat, stats = fused_heads(
        x_flat, params["pos_hid_wT"], params["pos_hid_b"],
        params["clf_wT"], params["clf_b"], tgt, head_sizes)

    s = jnp.sum(stats, axis=0)                                         # (2, 128)
    loss_sums = s[0, :NH]
    valid = s[1, :NH]
    # mean CE over valid rows per head, summed over heads.  Guarded against the
    # all-ignored degenerate case (PyTorch would return NaN there).
    loss = jnp.sum(loss_sums / jnp.maximum(valid, 1.0))

    preds_bt = jnp.transpose(preds_flat.reshape(T, B, NH), (1, 0, 2))  # (B, T, NH)
    preds = [preds_bt[:, :, 0], preds_bt[:, :, 1:]]
    return loss, preds


# ----------------------------------------------------------------------------
# Deterministic parameter construction
# ----------------------------------------------------------------------------

def make_params(key, *, word_vocab, pos_vocab, feats_lens, emb_dim, hidden,
                num_layers, deep_hid):
    def nrm(k, shape, scale=0.1):
        return (scale * jax.random.normal(k, shape)).astype(jnp.float32)

    keys = iter(jax.random.split(key, 128))
    H = hidden
    params = {"hidden": H}

    emb = nrm(next(keys), (word_vocab, emb_dim))
    params["word_emb"] = emb.at[0].set(0.0)                            # padding_idx=0

    layers = []
    in_size = emb_dim
    for _ in range(num_layers):
        w_ihT_f = nrm(next(keys), (in_size, 4 * H))
        w_hhT_f = nrm(next(keys), (H, 4 * H))
        b_f = nrm(next(keys), (1, 4 * H))           # b_ih + b_hh pre-summed
        w_ihT_b = nrm(next(keys), (in_size, 4 * H))
        w_hhT_b = nrm(next(keys), (H, 4 * H))
        b_b = nrm(next(keys), (1, 4 * H))
        wgT = nrm(next(keys), (in_size, 2 * H))
        bg = jnp.zeros((1, 2 * H), jnp.float32)     # gate bias zeroed in __init__
        whT = nrm(next(keys), (in_size, 2 * H))
        bh = jnp.zeros((1, 2 * H), jnp.float32)     # highway bias zeroed in __init__
        layers.append({
            # fused x-projection: [fwd gates | bwd gates | hwy-gate | hwy-transform]
            "w_xT": jnp.concatenate([w_ihT_f, w_ihT_b, wgT, whT], axis=1),
            "b_x": jnp.concatenate([b_f, b_b, bg, bh], axis=1),
            "w_hhT_f": w_hhT_f,
            "w_hhT_b": w_hhT_b,
        })
        in_size = 2 * H
    params["lstm_layers"] = layers

    params["pos_hid_wT"] = nrm(next(keys), (2 * H, deep_hid))
    params["pos_hid_b"] = nrm(next(keys), (1, deep_hid))

    # NOTE: __init__ zeros pos_clf / feats_clf; random init used here so the
    # classifier matmuls exercise the kernels (shapes identical).
    head_sizes = [pos_vocab] + list(feats_lens)
    w_heads = [nrm(next(keys), (deep_hid, c)) for c in head_sizes]
    b_heads = [nrm(next(keys), (1, c)) for c in head_sizes]
    c_tot = sum(head_sizes)
    c_pad = ((c_tot + 127) // 128) * 128            # lane-dense classifier matmul
    params["clf_wT"] = jnp.pad(jnp.concatenate(w_heads, axis=1),
                               ((0, 0), (0, c_pad - c_tot)))
    params["clf_b"] = jnp.pad(jnp.concatenate(b_heads, axis=1),
                              ((0, 0), (0, c_pad - c_tot)))
    params["head_sizes"] = tuple(head_sizes)
    return params


# ----------------------------------------------------------------------------
# TODO(synk): CharacterModel / pretrained-embedding branches and ragged
# pack_padded_sequence (unequal sentlens) are not implemented; dropout /
# WordDropout are identity (eval mode); bf16 matmul casting (v6e/v7x) left out
# to preserve f32 reference numerics.
# ----------------------------------------------------------------------------

if __name__ == "__main__":
    B, T = 8, 8
    WORD_VOCAB, POS_VOCAB = 50, 12
    FEATS_LENS = [5, 4, 6]
    EMB, HID, LAYERS, DEEP = 32, 32, 2, 64

    key = jax.random.PRNGKey(0)
    kp, kw, kpo, kf = jax.random.split(key, 4)

    params = make_params(kp, word_vocab=WORD_VOCAB, pos_vocab=POS_VOCAB,
                         feats_lens=FEATS_LENS, emb_dim=EMB, hidden=HID,
                         num_layers=LAYERS, deep_hid=DEEP)

    word = jax.random.randint(kw, (B, T), 1, WORD_VOCAB, dtype=jnp.int32)
    pos = jax.random.randint(kpo, (B, T), 0, POS_VOCAB, dtype=jnp.int32)
    feats = jnp.stack(
        [jax.random.randint(k, (B, T), 0, l, dtype=jnp.int32)
         for k, l in zip(jax.random.split(kf, len(FEATS_LENS)), FEATS_LENS)],
        axis=2)

    loss, preds = tagger_forward(params, word, pos, feats)
    jax.block_until_ready(loss)
    jax.block_until_ready(preds)

    assert preds[0].shape == (B, T)
    assert preds[1].shape == (B, T, len(FEATS_LENS))
    assert bool(jnp.isfinite(loss))
    print("KERNEL_OK")
</pallas_src>

<mosaic_0001>
module attributes {stable_mosaic.version = 11 : i64} {
  func.func @linear_kernel(%arg0: i32, %arg1: memref<64x32xf32, #tpu.memory_space<vmem>>, %arg2: memref<32x384xf32, #tpu.memory_space<vmem>>, %arg3: memref<1x384xf32, #tpu.memory_space<vmem>>, %arg4: memref<64x384xf32, #tpu.memory_space<vmem>>) attributes {dimension_semantics = [#tpu.dimension_semantics<parallel>], iteration_bounds = array<i64: 1>, scalar_prefetch = 0 : i64, scratch_operands = 0 : i64, tpu.core_type = #tpu.core_type<tc>, window_params = [{transform_indices = @transform_0, window_bounds = array<i64: 64, 32>}, {pipeline_mode = #tpu.pipeline_mode<synchronous>, transform_indices = @transform_1, window_bounds = array<i64: 32, 384>}, {pipeline_mode = #tpu.pipeline_mode<synchronous>, transform_indices = @transform_2, window_bounds = array<i64: 1, 384>}, {transform_indices = @transform_3, window_bounds = array<i64: 64, 384>}]} {
    %c0 = arith.constant 0 : index
    %c0_0 = arith.constant 0 : index
    %0 = vector.load %arg1[%c0, %c0_0] : memref<64x32xf32, #tpu.memory_space<vmem>>, vector<64x32xf32>
    %c0_1 = arith.constant 0 : index
    %c0_2 = arith.constant 0 : index
    %1 = vector.load %arg2[%c0_1, %c0_2] : memref<32x384xf32, #tpu.memory_space<vmem>>, vector<32x384xf32>
    %cst = arith.constant dense<0.000000e+00> : vector<64x384xf32>
    %2 = tpu.matmul %0, %1, %cst {dimension_numbers = #tpu.dot_dimension_numbers<[1], [0], [0], [1], [0, 0, 1, 1], [], []>} : vector<64x32xf32>, vector<32x384xf32>, vector<64x384xf32> -> vector<64x384xf32>
    %c0_3 = arith.constant 0 : index
    %c0_4 = arith.constant 0 : index
    %3 = vector.load %arg3[%c0_3, %c0_4] : memref<1x384xf32, #tpu.memory_space<vmem>>, vector<1x384xf32>
    %4 = vector.broadcast %3 : vector<1x384xf32> to vector<64x384xf32>
    %5 = arith.addf %2, %4 : vector<64x384xf32>
    %c0_5 = arith.constant 0 : index
    %c0_6 = arith.constant 0 : index
    %6 = vector.load %arg4[%c0_5, %c0_6] : memref<64x384xf32, #tpu.memory_space<vmem>>, vector<64x384xf32>
    tpu.vector_store %arg4[%c0_5, %c0_6], %5 {strides = array<i32>} : memref<64x384xf32, #tpu.memory_space<vmem>>, vector<64x384xf32>,
    return
  }
  func.func @transform_0(%arg0: i32) -> (i32, i32) {
    %c0_i32 = arith.constant 0 : i32
    %c0_i32_0 = arith.constant 0 : i32
    return %arg0, %c0_i32 : i32, i32
  }
  func.func @transform_1(%arg0: i32) -> (i32, i32) {
    %c0_i32 = arith.constant 0 : i32
    %c0_i32_0 = arith.constant 0 : i32
    %c0_i32_1 = arith.constant 0 : i32
    return %c0_i32, %c0_i32_0 : i32, i32
  }
  func.func @transform_2(%arg0: i32) -> (i32, i32) {
    %c0_i32 = arith.constant 0 : i32
    %c0_i32_0 = arith.constant 0 : i32
    %c0_i32_1 = arith.constant 0 : i32
    return %c0_i32, %c0_i32_0 : i32, i32
  }
  func.func @transform_3(%arg0: i32) -> (i32, i32) {
    %c0_i32 = arith.constant 0 : i32
    %c0_i32_0 = arith.constant 0 : i32
    return %arg0, %c0_i32 : i32, i32
  }
}

</mosaic_0001>

<llo_original>
// kernel: tpu_custom_call.1
$region0: #{tpu_custom_call.1}
  #allocation0 [shape = 'u32[]', space=smem, size = 0x4, offset = 0x4, fixed_abs, tag = 'smem constant byte address 0x4 - core index']
  #allocation1 [shape = 'u32[144,128]{1,0:T(1,128)}', space=vmem, size = 0x12000, scoped, tag = 'internal scratch']
  %s0 = inlined_call_operand.vmem [shape: f32[64,32], index: 0, kind: input, shape index: {}]
  %s1 = inlined_call_operand.vmem [shape: f32[32,384], index: 1, kind: input, shape index: {}]
  %s2 = inlined_call_operand.vmem [shape: f32[1,384], index: 2, kind: input, shape index: {}]
  %s3 = inlined_call_operand.hbm [shape: f32[64,384], index: 3, kind: output, shape index: {}]
  %s4 = sld [smem:[#allocation0]]
  $region22: #{tpu_custom_call.1} parent=0
    _
  %s6 = ssub.s32 1, %s4
  %s7 = scalar_select 0, %s6, %s4
  $region1: #{tpu_custom_call.1} parent=0
    #allocation2 [shape = 'u8[98304]{0}', space=vmem, size = 0x18000, scoped, tag = 'output window, operand 0, single buffered']
    #allocation3 [shape = 's32[1]{0}', space=sflag, size = 0x4, scoped, tag = 'scoped memory for tpu_custom_call.1']
    %8 = vsyncpa [#allocation3], 0
    // Predicated region
    $region2: #{tpu_custom_call.1} parent=1 // pred_check
      _
    $region3: #{tpu_custom_call.1} parent=1 // pred_check_branch
      %10 = sbr.rel (0) target = $region5
    $region4: #{tpu_custom_call.1} parent=1 // pred_region
      _
    $region5: #{tpu_custom_call.1} parent=1 // pred_fallthru
      _
    // Predicated region
    $region6: #{tpu_custom_call.1} parent=1 // pred_check
      _
    $region7: #{tpu_custom_call.1} parent=1 // pred_check_branch
      %12 = sbr.rel (0) target = $region9
    $region8: #{tpu_custom_call.1} parent=1 // pred_region
      _
    $region9: #{tpu_custom_call.1} parent=1 // pred_fallthru
      _
    // Predicated region
    $region10: #{tpu_custom_call.1} parent=1 // pred_check
      _
    $region11: #{tpu_custom_call.1} parent=1 // pred_check_branch
      %14 = sbr.rel (0) target = $region13
    $region12: #{tpu_custom_call.1} parent=1 // pred_region
      _
    $region13: #{tpu_custom_call.1} parent=1 // pred_fallthru
      _
    %v15 = vld [vmem:[%s0] sm:$0xff]
    %v16 = vld [vmem:[%s0 + $0x8] sm:$0xff]
    %v17 = vld [vmem:[%s0 + $0x10] sm:$0xff]
    %v18 = vld [vmem:[%s0 + $0x18] sm:$0xff]
    %v19 = vld [vmem:[%s0 + $0x20] sm:$0xff]
    %v20 = vld [vmem:[%s0 + $0x28] sm:$0xff]
    %v21 = vld [vmem:[%s0 + $0x30] sm:$0xff]
    %v22 = vld [vmem:[%s0 + $0x38] sm:$0xff]
    %v23 = vld [vmem:[%s1] sm:$0xff]
    %v24 = vld [vmem:[%s1 + $0x8] sm:$0xff]
    %v25 = vld [vmem:[%s1 + $0x10] sm:$0xff]
    %v26 = vld [vmem:[%s1 + $0x18] sm:$0xff]
    %v27 = vld [vmem:[%s1 + $0x20] sm:$0xff]
    %v28 = vld [vmem:[%s1 + $0x28] sm:$0xff]
    %v29 = vld [vmem:[%s1 + $0x30] sm:$0xff]
    %v30 = vld [vmem:[%s1 + $0x38] sm:$0xff]
    %v31 = vld [vmem:[%s1 + $0x40] sm:$0xff]
    %v32 = vld [vmem:[%s1 + $0x48] sm:$0xff]
    %v33 = vld [vmem:[%s1 + $0x50] sm:$0xff]
    %v34 = vld [vmem:[%s1 + $0x58] sm:$0xff]
    %v35 = vld [vmem:[%s2] sm:$0x7]
    %v37 = vlaneseq
    %v38 = vshrl.u32 %v37, 7
    %v39 = vsub.s32 0, %v38
    %v40 = vrot.slane %v35, %v39
    %v41 = vlaneseq
    %v42 = vshrl.u32 %v41, 7
    %v43 = vsub.s32 1, %v42
    %v44 = vrot.slane %v35, %v43
    %v45 = vlaneseq
    %v46 = vshrl.u32 %v45, 7
    %v47 = vsub.s32 2, %v46
    %v48 = vrot.slane %v35, %v47
    %vm52 = vcmask 261120
    %v54 = vsel %vm52, %v15, 0
    %v57 = vsel %vm52, %v16, 0
    %v60 = vsel %vm52, %v17, 0
    %v63 = vsel %vm52, %v18, 0
    %v66 = vsel %vm52, %v19, 0
    %v69 = vsel %vm52, %v20, 0
    %v72 = vsel %vm52, %v21, 0
    %v75 = vsel %vm52, %v22, 0
    %77 = vmatprep.subr.mxu0 %v24
    %78 = vmatpush1.msra.mxu0 %v23
    %79 = vmatprep.subr.mxu0 %v27
    %80 = vmatpush1.msra.mxu0 %v26
    %81 = vmatprep.subr.mxu0 %v30
    %82 = vmatpush1.msra.mxu0 %v29
    %83 = vmatprep.subr.mxu0 %v33
    %84 = vmatpush1.msra.mxu0 %v32
    %85 = vmatprep.subr.mxu0 0.0
    %86 = vmatpush1.msra.mxu0 0.0
    %87 = vmatprep.subr.mxu0 0.0
    %88 = vmatpush1.msra.mxu0 0.0
    %89 = vmatprep.subr.mxu0 0.0
    %90 = vmatpush1.msra.mxu0 0.0
    %91 = vmatprep.subr.mxu0 0.0
    %92 = vmatpush1.msra.mxu0 0.0
    %93 = vmatprep.subr.mxu0 0.0
    %94 = vmatpush1.msra.mxu0 0.0
    %95 = vmatprep.subr.mxu0 0.0
    %96 = vmatpush1.msra.mxu0 0.0
    %97 = vmatprep.subr.mxu0 0.0
    %98 = vmatpush1.msra.mxu0 0.0
    %99 = vmatprep.subr.mxu0 0.0
    %100 = vmatpush1.msra.mxu0 0.0
    %101 = vmatprep.subr.mxu0 0.0
    %102 = vmatpush1.msra.mxu0 0.0
    %103 = vmatprep.subr.mxu0 0.0
    %104 = vmatpush1.msra.mxu0 0.0
    %105 = vmatprep.subr.mxu0 0.0
    %106 = vmatpush1.msra.mxu0 0.0
    %107 = vmatprep.subr.mxu0 0.0
    %108 = vmatpush1.msra.mxu0 0.0
    %109 = vmatprep.subr.mxu0 0.0
    %110 = vmatpush1.msra.mxu0 0.0
    %111 = vmatprep.subr.mxu0 0.0
    %112 = vmatpush1.msra.mxu0 0.0
    %113 = vmatprep.subr.mxu0 0.0
    %114 = vmatpush1.msra.mxu0 0.0
    %115 = vmatprep.subr.mxu0 0.0
    %116 = vmatpush1.msra.mxu0 0.0
    %117 = vmatprep.subr.mxu0 0.0
    %118 = vmatpush1.msra.mxu0 0.0
    %119 = vmatprep.subr.mxu0 0.0
    %120 = vmatpush1.msra.mxu0 0.0
    %121 = vmatprep.subr.mxu0 0.0
    %122 = vmatpush1.msra.mxu0 0.0
    %123 = vmatprep.subr.mxu0 0.0
    %124 = vmatpush1.msra.mxu0 0.0
    %125 = vmatprep.subr.mxu0 0.0
    %126 = vmatpush1.msra.mxu0 0.0
    %127 = vmatprep.subr.mxu0 0.0
    %128 = vmatpush1.msra.mxu0 0.0
    %129 = vmatprep.subr.mxu0 0.0
    %130 = vmatpush1.msra.mxu0 0.0
    %131 = vmatprep.subr.mxu0 0.0
    %132 = vmatpush1.msra.mxu0 0.0
    %133 = vmatprep.subr.mxu0 0.0
    %134 = vmatpush1.msra.mxu0 0.0
    %135 = vmatprep.subr.mxu0 0.0
    %136 = vmatpush1.msra.mxu0 0.0
    %137 = vmatprep.subr.mxu0 0.0
    %138 = vmatpush1.msra.mxu0 0.0
    %139 = vmatprep.subr.mxu0 0.0
    %140 = vmatpush1.msra.mxu0 0.0
    %141 = vmatprep.mubr.f32.mxu0 0.0
    %142 = vmatmul.mubr.f32.gmra.mrb[0].mxu0 %v54
    %v143 = vpop.f32.mrb[0].mxu0
    %v144 = vadd.f32 %v40, %v143
    %v145 = vpop.f32.mrb[0].mxu0
    %v146 = vadd.f32 %v44, %v145
    %147 = vmatprep.mubr.f32.mxu0 0.0
    %148 = vmatmul.mubr.f32.gmra.mrb[0].mxu0 %v57
    %v149 = vpop.f32.mrb[0].mxu0
    %v150 = vadd.f32 %v40, %v149
    %v151 = vpop.f32.mrb[0].mxu0
    %v152 = vadd.f32 %v44, %v151
    %153 = vmatprep.mubr.f32.mxu0 0.0
    %154 = vmatmul.mubr.f32.gmra.mrb[0].mxu0 %v60
    %v155 = vpop.f32.mrb[0].mxu0
    %v156 = vadd.f32 %v40, %v155
    %v157 = vpop.f32.mrb[0].mxu0
    %v158 = vadd.f32 %v44, %v157
    %159 = vmatprep.mubr.f32.mxu0 0.0
    %160 = vmatmul.mubr.f32.gmra.mrb[0].mxu0 %v63
    %v161 = vpop.f32.mrb[0].mxu0
    %v162 = vadd.f32 %v40, %v161
    %v163 = vpop.f32.mrb[0].mxu0
    %v164 = vadd.f32 %v44, %v163
    %165 = vmatprep.mubr.f32.mxu0 0.0
    %166 = vmatmul.mubr.f32.gmra.mrb[0].mxu0 %v66
    %v167 = vpop.f32.mrb[0].mxu0
    %v168 = vadd.f32 %v40, %v167
    %v169 = vpop.f32.mrb[0].mxu0
    %v170 = vadd.f32 %v44, %v169
    %171 = vmatprep.mubr.f32.mxu0 0.0
    %172 = vmatmul.mubr.f32.gmra.mrb[0].mxu0 %v69
    %v173 = vpop.f32.mrb[0].mxu0
    %v174 = vadd.f32 %v40, %v173
    %v175 = vpop.f32.mrb[0].mxu0
    %v176 = vadd.f32 %v44, %v175
    %177 = vmatprep.mubr.f32.mxu0 0.0
    %178 = vmatmul.mubr.f32.gmra.mrb[0].mxu0 %v72
    %v179 = vpop.f32.mrb[0].mxu0
    %v180 = vadd.f32 %v40, %v179
    %v181 = vpop.f32.mrb[0].mxu0
    %v182 = vadd.f32 %v44, %v181
    %183 = vmatprep.mubr.f32.mxu0 0.0
    %184 = vmatmul.mubr.f32.gmra.mrb[0].mxu0 %v75
    %v185 = vpop.f32.mrb[0].mxu0
    %v186 = vadd.f32 %v40, %v185
    %v187 = vpop.f32.mrb[0].mxu0
    %v188 = vadd.f32 %v44, %v187
    %189 = vdwg.mxu0
    %190 = vmatprep.subr.mxu0 0.0
    %191 = vmatpush1.msra.mxu0 %v25
    %192 = vmatprep.subr.mxu0 0.0
    %193 = vmatpush1.msra.mxu0 %v28
    %194 = vmatprep.subr.mxu0 0.0
    %195 = vmatpush1.msra.mxu0 %v31
    %196 = vmatprep.subr.mxu0 0.0
    %197 = vmatpush1.msra.mxu0 %v34
    %198 = vmatprep.subr.mxu0 0.0
    %199 = vmatpush1.msra.mxu0 0.0
    %200 = vmatprep.subr.mxu0 0.0
    %201 = vmatpush1.msra.mxu0 0.0
    %202 = vmatprep.subr.mxu0 0.0
    %203 = vmatpush1.msra.mxu0 0.0
    %204 = vmatprep.subr.mxu0 0.0
    %205 = vmatpush1.msra.mxu0 0.0
    %206 = vmatprep.subr.mxu0 0.0
    %207 = vmatpush1.msra.mxu0 0.0
    %208 = vmatprep.subr.mxu0 0.0
    %209 = vmatpush1.msra.mxu0 0.0
    %210 = vmatprep.subr.mxu0 0.0
    %211 = vmatpush1.msra.mxu0 0.0
    %212 = vmatprep.subr.mxu0 0.0
    %213 = vmatpush1.msra.mxu0 0.0
    %214 = vmatprep.subr.mxu0 0.0
    %215 = vmatpush1.msra.mxu0 0.0
    %216 = vmatprep.subr.mxu0 0.0
    %217 = vmatpush1.msra.mxu0 0.0
    %218 = vmatprep.subr.mxu0 0.0
    %219 = vmatpush1.msra.mxu0 0.0
    %220 = vmatprep.subr.mxu0 0.0
    %221 = vmatpush1.msra.mxu0 0.0
    %222 = vmatprep.subr.mxu0 0.0
    %223 = vmatpush1.msra.mxu0 0.0
    %224 = vmatprep.subr.mxu0 0.0
    %225 = vmatpush1.msra.mxu0 0.0
    %226 = vmatprep.subr.mxu0 0.0
    %227 = vmatpush1.msra.mxu0 0.0
    %228 = vmatprep.subr.mxu0 0.0
    %229 = vmatpush1.msra.mxu0 0.0
    %230 = vmatprep.subr.mxu0 0.0
    %231 = vmatpush1.msra.mxu0 0.0
    %232 = vmatprep.subr.mxu0 0.0
    %233 = vmatpush1.msra.mxu0 0.0
    %234 = vmatprep.subr.mxu0 0.0
    %235 = vmatpush1.msra.mxu0 0.0
    %236 = vmatprep.subr.mxu0 0.0
    %237 = vmatpush1.msra.mxu0 0.0
    %238 = vmatprep.subr.mxu0 0.0
    %239 = vmatpush1.msra.mxu0 0.0
    %240 = vmatprep.subr.mxu0 0.0
    %241 = vmatpush1.msra.mxu0 0.0
    %242 = vmatprep.subr.mxu0 0.0
    %243 = vmatpush1.msra.mxu0 0.0
    %244 = vmatprep.subr.mxu0 0.0
    %245 = vmatpush1.msra.mxu0 0.0
    %246 = vmatprep.subr.mxu0 0.0
    %247 = vmatpush1.msra.mxu0 0.0
    %248 = vmatprep.subr.mxu0 0.0
    %249 = vmatpush1.msra.mxu0 0.0
    %250 = vmatprep.subr.mxu0 0.0
    %251 = vmatpush1.msra.mxu0 0.0
    %252 = vmatprep.subr.mxu0 0.0
    %253 = vmatpush1.msra.mxu0 0.0
    %254 = vmatprep.mubr.f32.mxu0 0.0
    %255 = vmatmul.mubr.f32.gmra.mrb[0].mxu0 %v54
    %v256 = vpop.f32.mrb[0].mxu0
    %v257 = vadd.f32 %v48, %v256
    %v258 = vpop.f32.mrb[0].mxu0
    %259 = vmatprep.mubr.f32.mxu0 0.0
    %260 = vmatmul.mubr.f32.gmra.mrb[0].mxu0 %v57
    %v261 = vpop.f32.mrb[0].mxu0
    %v262 = vadd.f32 %v48, %v261
    %v263 = vpop.f32.mrb[0].mxu0
    %264 = vmatprep.mubr.f32.mxu0 0.0
    %265 = vmatmul.mubr.f32.gmra.mrb[0].mxu0 %v60
    %v266 = vpop.f32.mrb[0].mxu0
    %v267 = vadd.f32 %v48, %v266
    %v268 = vpop.f32.mrb[0].mxu0
    %269 = vmatprep.mubr.f32.mxu0 0.0
    %270 = vmatmul.mubr.f32.gmra.mrb[0].mxu0 %v63
    %v271 = vpop.f32.mrb[0].mxu0
    %v272 = vadd.f32 %v48, %v271
    %v273 = vpop.f32.mrb[0].mxu0
    %274 = vmatprep.mubr.f32.mxu0 0.0
    %275 = vmatmul.mubr.f32.gmra.mrb[0].mxu0 %v66
    %v276 = vpop.f32.mrb[0].mxu0
    %v277 = vadd.f32 %v48, %v276
    %v278 = vpop.f32.mrb[0].mxu0
    %279 = vmatprep.mubr.f32.mxu0 0.0
    %280 = vmatmul.mubr.f32.gmra.mrb[0].mxu0 %v69
    %v281 = vpop.f32.mrb[0].mxu0
    %v282 = vadd.f32 %v48, %v281
    %v283 = vpop.f32.mrb[0].mxu0
    %284 = vmatprep.mubr.f32.mxu0 0.0
    %285 = vmatmul.mubr.f32.gmra.mrb[0].mxu0 %v72
    %v286 = vpop.f32.mrb[0].mxu0
    %v287 = vadd.f32 %v48, %v286
    %v288 = vpop.f32.mrb[0].mxu0
    %289 = vmatprep.mubr.f32.mxu0 0.0
    %290 = vmatmul.mubr.f32.gmra.mrb[0].mxu0 %v75
    %v291 = vpop.f32.mrb[0].mxu0
    %v292 = vadd.f32 %v48, %v291
    %v293 = vpop.f32.mrb[0].mxu0
    %294 = vdwg.mxu0
    %295 = vst [vmem:[#allocation2] sm:$0xff] %v144
    %296 = vst [vmem:[#allocation2 + $0x8] sm:$0xff] %v146
    %297 = vst [vmem:[#allocation2 + $0x10] sm:$0xff] %v257
    %298 = vst [vmem:[#allocation2 + $0x18] sm:$0xff] %v150
    %299 = vst [vmem:[#allocation2 + $0x20] sm:$0xff] %v152
    %300 = vst [vmem:[#allocation2 + $0x28] sm:$0xff] %v262
    %301 = vst [vmem:[#allocation2 + $0x30] sm:$0xff] %v156
    %302 = vst [vmem:[#allocation2 + $0x38] sm:$0xff] %v158
    %303 = vst [vmem:[#allocation2 + $0x40] sm:$0xff] %v267
    %304 = vst [vmem:[#allocation2 + $0x48] sm:$0xff] %v162
    %305 = vst [vmem:[#allocation2 + $0x50] sm:$0xff] %v164
    %306 = vst [vmem:[#allocation2 + $0x58] sm:$0xff] %v272
    %307 = vst [vmem:[#allocation2 + $0x60] sm:$0xff] %v168
    %308 = vst [vmem:[#allocation2 + $0x68] sm:$0xff] %v170
    %309 = vst [vmem:[#allocation2 + $0x70] sm:$0xff] %v277
    %310 = vst [vmem:[#allocation2 + $0x78] sm:$0xff] %v174
    %311 = vst [vmem:[#allocation2 + $0x80] sm:$0xff] %v176
    %312 = vst [vmem:[#allocation2 + $0x88] sm:$0xff] %v282
    %313 = vst [vmem:[#allocation2 + $0x90] sm:$0xff] %v180
    %314 = vst [vmem:[#allocation2 + $0x98] sm:$0xff] %v182
    %315 = vst [vmem:[#allocation2 + $0xa0] sm:$0xff] %v287
    %316 = vst [vmem:[#allocation2 + $0xa8] sm:$0xff] %v186
    %317 = vst [vmem:[#allocation2 + $0xb0] sm:$0xff] %v188
    %318 = vst [vmem:[#allocation2 + $0xb8] sm:$0xff] %v292
    // Predicated region
    $region14: #{tpu_custom_call.1} parent=1 // pred_check
      _
    $region15: #{tpu_custom_call.1} parent=1 // pred_check_branch
      %320 = sbr.rel (0) target = $region17
    $region16: #{tpu_custom_call.1} parent=1 // pred_region
      %s322 = ssub.s32 3072, 3072
      %323 = vsyncadd [#allocation3], %s322
      %s324 = sshll.u32 [#allocation2], 4
      %s325 = int_to_ptr.vmem [resolvable:$true] %s324
      %330 = dma.vmem_to_hbm [thread:$0]  %s325, 3072, %s3, [#allocation3], 384, 384, 24
    $region17: #{tpu_custom_call.1} parent=1 // pred_fallthru
      _
    // Predicated region
    $region18: #{tpu_custom_call.1} parent=1 // pred_check
      _
    $region19: #{tpu_custom_call.1} parent=1 // pred_check_branch
      %332 = sbr.rel (0) target = $region21
    $region20: #{tpu_custom_call.1} parent=1 // pred_region
      %333 = dma.done [#allocation3], 3072
    $region21: #{tpu_custom_call.1} parent=1 // pred_fallthru
      _
    %334 = vsyncpa [#allocation3], 1

</llo_original>
